<compile_context>
chip_gen: v6e
topology: v6e:2x2x1
jax: 0.10.0
libtpu: 0.0.40
codegen_flags: <defaults>
</compile_context>

<pallas_src>
import functools

import jax
import jax.numpy as jnp
from jax import lax
from jax.experimental import pallas as pl
from jax.experimental.pallas import tpu as pltpu

BN_EPS = 1e-5
LANES = 128


def _round_up(x, m):
    return (x + m - 1) // m * m


# ---------------- stage 1: conv matmul + per-tile BN partial stats ----------------
def conv_stats_kernel(p_ref, w_ref, y_ref, s_ref):
    # p_ref: (TM, K) bf16 im2col patches; w_ref: (K, Cpad) bf16 (resident across the grid).
    y = jnp.dot(p_ref[...], w_ref[...], preferred_element_type=jnp.float32)  # (TM, Cpad) f32
    y_ref[...] = y
    # Partial BN statistics for this M-tile. Padded rows are all-zero patches -> zero conv
    # output -> contribute 0 to both sums, so no masking is needed; padded channels likewise.
    ssum = jnp.sum(y, axis=0, keepdims=True)        # (1, Cpad)
    ssq = jnp.sum(y * y, axis=0, keepdims=True)     # (1, Cpad)
    row = lax.broadcasted_iota(jnp.int32, (8, y.shape[1]), 0)
    stats = jnp.where(row == 0, ssum, 0.0) + jnp.where(row == 1, ssq, 0.0)
    s_ref[...] = stats[None]                        # (1, 8, Cpad): row0=sum, row1=sumsq


# ---------------- stage 2: BN affine + ReLU (global stats already reduced) ----------------
def bn_relu_kernel(y_ref, scale_ref, shift_ref, o_ref):
    o_ref[...] = jnp.maximum(y_ref[...] * scale_ref[...] + shift_ref[...], 0.0)


# ---------------- stage 3: 3x3 / stride-2 / pad-1 max pool ----------------
def maxpool_kernel(ee_ref, eo_ref, oe_ref, oo_ref, o_ref):
    # *_ref: (1, H2+1, W2+1, C) row/col parity views of the zero-padded ReLU output.
    # Pooled (h2, w2) covers padded rows {2h2, 2h2+1, 2h2+2} x cols {2w2, 2w2+1, 2w2+2};
    # in parity space those become contiguous windows at offsets 0/1 (no strided access).
    h2, w2 = o_ref.shape[1], o_ref.shape[2]

    def tap(ref, dr, dc):
        return ref[0, pl.ds(dr, h2), pl.ds(dc, w2), :]

    m = tap(ee_ref, 0, 0)
    for ref, dr, dc in ((ee_ref, 0, 1), (ee_ref, 1, 0), (ee_ref, 1, 1),
                        (eo_ref, 0, 0), (eo_ref, 1, 0),
                        (oe_ref, 0, 0), (oe_ref, 0, 1),
                        (oo_ref, 0, 0)):
        m = jnp.maximum(m, tap(ref, dr, dc))
    o_ref[0] = m


@functools.partial(jax.jit, static_argnames=("kernel_size", "stride", "do_maxpool"))
def resnet_input_block(x, conv_w, gamma, beta, *, kernel_size=7, stride=2, do_maxpool=True):
    N, Cin, H, W = x.shape
    Cout = conv_w.shape[0]
    KH = KW = kernel_size
    pad = (kernel_size - 1) // 2
    Ho = (H + 2 * pad - KH) // stride + 1
    Wo = (W + 2 * pad - KW) // stride + 1

    M = N * Ho * Wo
    K = Cin * KH * KW
    Cpad = max(LANES, _round_up(Cout, LANES))    # lane-dense outputs (unmasked stores)
    TM = min(2048, _round_up(M, 8))              # M tile: ~4 MiB VMEM footprint, safe on v5e/v6e/v7x
    M_pad = _round_up(M, TM)
    n_tiles = M_pad // TM

    # ---- glue: im2col patch extraction (NCHW -> (M_pad, K)), fed to the MXU as bf16 ----
    # TODO(synk): patch extraction (strided gather) stays in XLA glue; moving it in-kernel
    # needs strided / data-dependent DMA that BlockSpec cannot express cleanly here.
    xpad = jnp.pad(x, ((0, 0), (0, 0), (pad, pad), (pad, pad)))
    taps = [xpad[:, :, kh:kh + stride * Ho:stride, kw:kw + stride * Wo:stride]
            for kh in range(KH) for kw in range(KW)]
    patches = jnp.stack(taps, axis=-1)           # (N, Cin, Ho, Wo, KH*KW)
    patches = patches.transpose(0, 2, 3, 1, 4)   # (N, Ho, Wo, Cin, KH*KW)
    patches = patches.reshape(M, K)
    patches = jnp.pad(patches, ((0, M_pad - M), (0, 0))).astype(jnp.bfloat16)

    wmat = conv_w.reshape(Cout, K).T             # (K, Cout), same (ci, kh, kw) order
    wmat = jnp.pad(wmat, ((0, 0), (0, Cpad - Cout))).astype(jnp.bfloat16)
    gamma_p = jnp.pad(gamma.astype(jnp.float32), (0, Cpad - Cout))
    beta_p = jnp.pad(beta.astype(jnp.float32), (0, Cpad - Cout))

    # ---- stage 1: tiled conv matmul + per-tile BN partial sums ----
    y_raw, stats = pl.pallas_call(
        conv_stats_kernel,
        out_shape=(jax.ShapeDtypeStruct((M_pad, Cpad), jnp.float32),
                   jax.ShapeDtypeStruct((n_tiles, 8, Cpad), jnp.float32)),
        grid=(n_tiles,),
        in_specs=[pl.BlockSpec((TM, K), lambda i: (i, 0)),
                  pl.BlockSpec((K, Cpad), lambda i: (0, 0))],
        out_specs=(pl.BlockSpec((TM, Cpad), lambda i: (i, 0)),
                   pl.BlockSpec((1, 8, Cpad), lambda i: (i, 0, 0))),
        compiler_params=pltpu.CompilerParams(dimension_semantics=("parallel",)),
    )(patches, wmat)

    # ---- glue: reduce per-tile partials to global BN scale/shift (O(Cout) work) ----
    ssum = jnp.sum(stats[:, 0, :], axis=0)
    ssq = jnp.sum(stats[:, 1, :], axis=0)
    mean = ssum / M
    var = jnp.maximum(ssq / M - mean * mean, 0.0)   # biased variance (training-mode BN)
    scale = gamma_p * lax.rsqrt(var + BN_EPS)
    shift = beta_p - mean * scale

    # ---- stage 2: BN affine + ReLU, tiled over M ----
    y_norm = pl.pallas_call(
        bn_relu_kernel,
        out_shape=jax.ShapeDtypeStruct((M_pad, Cpad), jnp.float32),
        grid=(n_tiles,),
        in_specs=[pl.BlockSpec((TM, Cpad), lambda i: (i, 0)),
                  pl.BlockSpec((1, Cpad), lambda i: (0, 0)),
                  pl.BlockSpec((1, Cpad), lambda i: (0, 0))],
        out_specs=pl.BlockSpec((TM, Cpad), lambda i: (i, 0)),
        compiler_params=pltpu.CompilerParams(dimension_semantics=("parallel",)),
    )(y_raw, scale.reshape(1, Cpad), shift.reshape(1, Cpad))

    y = y_norm[:M].reshape(N, Ho, Wo, Cpad)      # NHWC, channels padded to 128 lanes

    if do_maxpool:
        H2 = (Ho - 1) // 2 + 1
        W2 = (Wo - 1) // 2 + 1
        # Zero padding is equivalent to -inf here: post-ReLU values are >= 0 and every
        # pooling window contains at least one real (non-padding) element.
        ypad = jnp.pad(y, ((0, 0), (1, 1), (1, 1), (0, 0)))

        # TODO(synk): the stride-2 row/col parity split stays in XLA glue (1x bytes, not a
        # 9x tap stack); the max reduction itself runs fully in-kernel on contiguous slices.
        def parity(r0, c0):
            v = ypad[:, r0::2, c0::2, :]
            return jnp.pad(v, ((0, 0), (0, H2 + 1 - v.shape[1]),
                               (0, W2 + 1 - v.shape[2]), (0, 0)))

        ee, eo, oe, oo = parity(0, 0), parity(0, 1), parity(1, 0), parity(1, 1)
        par_spec = pl.BlockSpec((1, H2 + 1, W2 + 1, Cpad), lambda n: (n, 0, 0, 0))
        y = pl.pallas_call(
            maxpool_kernel,
            out_shape=jax.ShapeDtypeStruct((N, H2, W2, Cpad), jnp.float32),
            grid=(N,),
            in_specs=[par_spec] * 4,
            out_specs=pl.BlockSpec((1, H2, W2, Cpad), lambda n: (n, 0, 0, 0)),
            compiler_params=pltpu.CompilerParams(dimension_semantics=("parallel",)),
        )(ee, eo, oe, oo)

    return y[..., :Cout].transpose(0, 3, 1, 2)   # back to NCHW


def reference(x, conv_w, gamma, beta):
    y = lax.conv_general_dilated(x, conv_w, window_strides=(2, 2),
                                 padding=((3, 3), (3, 3)),
                                 dimension_numbers=("NCHW", "OIHW", "NCHW"))
    mean = jnp.mean(y, axis=(0, 2, 3), keepdims=True)
    var = jnp.mean((y - mean) ** 2, axis=(0, 2, 3), keepdims=True)
    y = (y - mean) / jnp.sqrt(var + BN_EPS)
    y = y * gamma.reshape(1, -1, 1, 1) + beta.reshape(1, -1, 1, 1)
    y = jnp.maximum(y, 0.0)
    y = lax.reduce_window(y, -jnp.inf, lax.max, (1, 1, 3, 3), (1, 1, 2, 2),
                          padding=((0, 0), (0, 0), (1, 1), (1, 1)))
    return y


if __name__ == "__main__":
    key = jax.random.PRNGKey(0)
    k1, k2, k3, k4 = jax.random.split(key, 4)

    N, Cin, H, W = 2, 4, 16, 16
    Cout, Ksz = 8, 7

    x = jax.random.normal(k1, (N, Cin, H, W), jnp.float32)
    fan_in = Cin * Ksz * Ksz
    conv_w = jax.random.normal(k2, (Cout, Cin, Ksz, Ksz), jnp.float32) / jnp.sqrt(fan_in)
    gamma = 1.0 + 0.1 * jax.random.normal(k3, (Cout,), jnp.float32)
    beta = 0.1 * jax.random.normal(k4, (Cout,), jnp.float32)

    out = jax.block_until_ready(resnet_input_block(x, conv_w, gamma, beta))

    ref = jax.block_until_ready(reference(x, conv_w, gamma, beta))
    assert out.shape == ref.shape == (N, Cout, 4, 4), (out.shape, ref.shape)
    if not jnp.allclose(out, ref, atol=5e-2, rtol=5e-2):
        raise AssertionError("Pallas result mismatch vs JAX reference")

    print("KERNEL_OK")
</pallas_src>

<mosaic_0001>
module attributes {stable_mosaic.version = 11 : i64} {
  func.func @bn_relu_kernel(%arg0: i32, %arg1: memref<128x128xf32, #tpu.memory_space<vmem>>, %arg2: memref<1x128xf32, #tpu.memory_space<vmem>>, %arg3: memref<1x128xf32, #tpu.memory_space<vmem>>, %arg4: memref<128x128xf32, #tpu.memory_space<vmem>>) attributes {dimension_semantics = [#tpu.dimension_semantics<parallel>], iteration_bounds = array<i64: 1>, scalar_prefetch = 0 : i64, scratch_operands = 0 : i64, tpu.core_type = #tpu.core_type<tc>, window_params = [{transform_indices = @transform_0, window_bounds = array<i64: 128, 128>}, {pipeline_mode = #tpu.pipeline_mode<synchronous>, transform_indices = @transform_1, window_bounds = array<i64: 1, 128>}, {pipeline_mode = #tpu.pipeline_mode<synchronous>, transform_indices = @transform_2, window_bounds = array<i64: 1, 128>}, {transform_indices = @transform_3, window_bounds = array<i64: 128, 128>}]} {
    %c0 = arith.constant 0 : index
    %c0_0 = arith.constant 0 : index
    %0 = vector.load %arg1[%c0, %c0_0] : memref<128x128xf32, #tpu.memory_space<vmem>>, vector<128x128xf32>
    %c0_1 = arith.constant 0 : index
    %c0_2 = arith.constant 0 : index
    %1 = vector.load %arg2[%c0_1, %c0_2] : memref<1x128xf32, #tpu.memory_space<vmem>>, vector<1x128xf32>
    %2 = vector.broadcast %1 : vector<1x128xf32> to vector<128x128xf32>
    %3 = arith.mulf %0, %2 : vector<128x128xf32>
    %c0_3 = arith.constant 0 : index
    %c0_4 = arith.constant 0 : index
    %4 = vector.load %arg3[%c0_3, %c0_4] : memref<1x128xf32, #tpu.memory_space<vmem>>, vector<1x128xf32>
    %5 = vector.broadcast %4 : vector<1x128xf32> to vector<128x128xf32>
    %6 = arith.addf %3, %5 : vector<128x128xf32>
    %cst = arith.constant 0.000000e+00 : f32
    %7 = vector.broadcast %cst : f32 to vector<128x128xf32>
    %8 = arith.maximumf %6, %7 : vector<128x128xf32>
    %c0_5 = arith.constant 0 : index
    %c0_6 = arith.constant 0 : index
    %9 = vector.load %arg4[%c0_5, %c0_6] : memref<128x128xf32, #tpu.memory_space<vmem>>, vector<128x128xf32>
    tpu.vector_store %arg4[%c0_5, %c0_6], %8 {strides = array<i32>} : memref<128x128xf32, #tpu.memory_space<vmem>>, vector<128x128xf32>,
    return
  }
  func.func @transform_0(%arg0: i32) -> (i32, i32) {
    %c0_i32 = arith.constant 0 : i32
    %c0_i32_0 = arith.constant 0 : i32
    return %arg0, %c0_i32 : i32, i32
  }
  func.func @transform_1(%arg0: i32) -> (i32, i32) {
    %c0_i32 = arith.constant 0 : i32
    %c0_i32_0 = arith.constant 0 : i32
    %c0_i32_1 = arith.constant 0 : i32
    return %c0_i32, %c0_i32_0 : i32, i32
  }
  func.func @transform_2(%arg0: i32) -> (i32, i32) {
    %c0_i32 = arith.constant 0 : i32
    %c0_i32_0 = arith.constant 0 : i32
    %c0_i32_1 = arith.constant 0 : i32
    return %c0_i32, %c0_i32_0 : i32, i32
  }
  func.func @transform_3(%arg0: i32) -> (i32, i32) {
    %c0_i32 = arith.constant 0 : i32
    %c0_i32_0 = arith.constant 0 : i32
    return %arg0, %c0_i32 : i32, i32
  }
}

module attributes {stable_mosaic.version = 11 : i64} {
  func.func @conv_stats_kernel(%arg0: i32, %arg1: memref<128x196xbf16, #tpu.memory_space<vmem>>, %arg2: memref<196x128xbf16, #tpu.memory_space<vmem>>, %arg3: memref<128x128xf32, #tpu.memory_space<vmem>>, %arg4: memref<1x8x128xf32, #tpu.memory_space<vmem>>) attributes {dimension_semantics = [#tpu.dimension_semantics<parallel>], iteration_bounds = array<i64: 1>, scalar_prefetch = 0 : i64, scratch_operands = 0 : i64, tpu.core_type = #tpu.core_type<tc>, window_params = [{transform_indices = @transform_0, window_bounds = array<i64: 128, 196>}, {pipeline_mode = #tpu.pipeline_mode<synchronous>, transform_indices = @transform_1, window_bounds = array<i64: 196, 128>}, {transform_indices = @transform_2, window_bounds = array<i64: 128, 128>}, {transform_indices = @transform_3, window_bounds = array<i64: 1, 8, 128>}]} {
    %c0 = arith.constant 0 : index
    %c0_0 = arith.constant 0 : index
    %0 = vector.load %arg1[%c0, %c0_0] : memref<128x196xbf16, #tpu.memory_space<vmem>>, vector<128x196xbf16>
    %c0_1 = arith.constant 0 : index
    %c0_2 = arith.constant 0 : index
    %1 = vector.load %arg2[%c0_1, %c0_2] : memref<196x128xbf16, #tpu.memory_space<vmem>>, vector<196x128xbf16>
    %cst = arith.constant dense<0.000000e+00> : vector<128x128xf32>
    %2 = tpu.matmul %0, %1, %cst {dimension_numbers = #tpu.dot_dimension_numbers<[1], [0], [0], [1], [0, 0, 1, 1], [], []>} : vector<128x196xbf16>, vector<196x128xbf16>, vector<128x128xf32> -> vector<128x128xf32>
    %c0_3 = arith.constant 0 : index
    %c0_4 = arith.constant 0 : index
    %3 = vector.load %arg3[%c0_3, %c0_4] : memref<128x128xf32, #tpu.memory_space<vmem>>, vector<128x128xf32>
    tpu.vector_store %arg3[%c0_3, %c0_4], %2 {strides = array<i32>} : memref<128x128xf32, #tpu.memory_space<vmem>>, vector<128x128xf32>,
    %cst_5 = arith.constant dense<0.000000e+00> : vector<128xf32>
    %4 = vector.multi_reduction <add>, %2, %cst_5 [0] : vector<128x128xf32> to vector<128xf32>
    %5 = vector.shape_cast %4 : vector<128xf32> to vector<1x128xf32>
    %6 = arith.mulf %2, %2 : vector<128x128xf32>
    %cst_6 = arith.constant dense<0.000000e+00> : vector<128xf32>
    %7 = vector.multi_reduction <add>, %6, %cst_6 [0] : vector<128x128xf32> to vector<128xf32>
    %8 = vector.shape_cast %7 : vector<128xf32> to vector<1x128xf32>
    %9 = tpu.iota {dimensions = array<i32: 0>} : vector<8x128xi32>
    %c0_i32 = arith.constant 0 : i32
    %10 = vector.broadcast %c0_i32 : i32 to vector<8x128xi32>
    %11 = arith.cmpi eq, %9, %10 : vector<8x128xi32>
    %cst_7 = arith.constant 0.000000e+00 : f32
    %12 = vector.shape_cast %5 : vector<1x128xf32> to vector<1x128xf32>
    %13 = vector.broadcast %12 : vector<1x128xf32> to vector<8x128xf32>
    %14 = vector.broadcast %cst_7 : f32 to vector<8x128xf32>
    %15 = arith.select %11, %13, %14 : vector<8x128xi1>, vector<8x128xf32>
    %c1_i32 = arith.constant 1 : i32
    %16 = vector.broadcast %c1_i32 : i32 to vector<8x128xi32>
    %17 = arith.cmpi eq, %9, %16 : vector<8x128xi32>
    %cst_8 = arith.constant 0.000000e+00 : f32
    %18 = vector.shape_cast %8 : vector<1x128xf32> to vector<1x128xf32>
    %19 = vector.broadcast %18 : vector<1x128xf32> to vector<8x128xf32>
    %20 = vector.broadcast %cst_8 : f32 to vector<8x128xf32>
    %21 = arith.select %17, %19, %20 : vector<8x128xi1>, vector<8x128xf32>
    %22 = arith.addf %15, %21 : vector<8x128xf32>
    %23 = vector.shape_cast %22 : vector<8x128xf32> to vector<1x8x128xf32>
    %c0_9 = arith.constant 0 : index
    %c0_10 = arith.constant 0 : index
    %c0_11 = arith.constant 0 : index
    %24 = vector.load %arg4[%c0_9, %c0_10, %c0_11] : memref<1x8x128xf32, #tpu.memory_space<vmem>>, vector<1x8x128xf32>
    tpu.vector_store %arg4[%c0_9, %c0_10, %c0_11], %23 {strides = array<i32>} : memref<1x8x128xf32, #tpu.memory_space<vmem>>, vector<1x8x128xf32>,
    return
  }
  func.func @transform_0(%arg0: i32) -> (i32, i32) {
    %c0_i32 = arith.constant 0 : i32
    %c0_i32_0 = arith.constant 0 : i32
    return %arg0, %c0_i32 : i32, i32
  }
  func.func @transform_1(%arg0: i32) -> (i32, i32) {
    %c0_i32 = arith.constant 0 : i32
    %c0_i32_0 = arith.constant 0 : i32
    %c0_i32_1 = arith.constant 0 : i32
    return %c0_i32, %c0_i32_0 : i32, i32
  }
  func.func @transform_2(%arg0: i32) -> (i32, i32) {
    %c0_i32 = arith.constant 0 : i32
    %c0_i32_0 = arith.constant 0 : i32
    return %arg0, %c0_i32 : i32, i32
  }
  func.func @transform_3(%arg0: i32) -> (i32, i32, i32) {
    %c0_i32 = arith.constant 0 : i32
    %c0_i32_0 = arith.constant 0 : i32
    %c0_i32_1 = arith.constant 0 : i32
    return %arg0, %c0_i32, %c0_i32_0 : i32, i32, i32
  }
}

module attributes {stable_mosaic.version = 11 : i64} {
  func.func @maxpool_kernel(%arg0: i32, %arg1: memref<1x5x5x128xf32, #tpu.memory_space<vmem>>, %arg2: memref<1x5x5x128xf32, #tpu.memory_space<vmem>>, %arg3: memref<1x5x5x128xf32, #tpu.memory_space<vmem>>, %arg4: memref<1x5x5x128xf32, #tpu.memory_space<vmem>>, %arg5: memref<1x4x4x128xf32, #tpu.memory_space<vmem>>) attributes {dimension_semantics = [#tpu.dimension_semantics<parallel>], iteration_bounds = array<i64: 2>, scalar_prefetch = 0 : i64, scratch_operands = 0 : i64, tpu.core_type = #tpu.core_type<tc>, window_params = [{transform_indices = @transform_0, window_bounds = array<i64: 1, 5, 5, 128>}, {transform_indices = @transform_1, window_bounds = array<i64: 1, 5, 5, 128>}, {transform_indices = @transform_2, window_bounds = array<i64: 1, 5, 5, 128>}, {transform_indices = @transform_3, window_bounds = array<i64: 1, 5, 5, 128>}, {transform_indices = @transform_4, window_bounds = array<i64: 1, 4, 4, 128>}]} {
    %c0 = arith.constant 0 : index
    %c0_0 = arith.constant 0 : index
    %c0_1 = arith.constant 0 : index
    %c0_2 = arith.constant 0 : index
    %0 = vector.load %arg1[%c0, %c0_0, %c0_1, %c0_2] : memref<1x5x5x128xf32, #tpu.memory_space<vmem>>, vector<1x4x4x128xf32>
    %1 = vector.shape_cast %0 : vector<1x4x4x128xf32> to vector<4x4x128xf32>
    %c0_3 = arith.constant 0 : index
    %c0_4 = arith.constant 0 : index
    %c1 = arith.constant 1 : index
    %c0_5 = arith.constant 0 : index
    %2 = vector.load %arg1[%c0_3, %c0_4, %c1, %c0_5] : memref<1x5x5x128xf32, #tpu.memory_space<vmem>>, vector<1x4x4x128xf32>
    %3 = vector.shape_cast %2 : vector<1x4x4x128xf32> to vector<4x4x128xf32>
    %4 = arith.maximumf %1, %3 : vector<4x4x128xf32>
    %c0_6 = arith.constant 0 : index
    %c1_7 = arith.constant 1 : index
    %c0_8 = arith.constant 0 : index
    %c0_9 = arith.constant 0 : index
    %5 = vector.load %arg1[%c0_6, %c1_7, %c0_8, %c0_9] : memref<1x5x5x128xf32, #tpu.memory_space<vmem>>, vector<1x4x4x128xf32>
    %6 = vector.shape_cast %5 : vector<1x4x4x128xf32> to vector<4x4x128xf32>
    %7 = arith.maximumf %4, %6 : vector<4x4x128xf32>
    %c0_10 = arith.constant 0 : index
    %c1_11 = arith.constant 1 : index
    %c1_12 = arith.constant 1 : index
    %c0_13 = arith.constant 0 : index
    %8 = vector.load %arg1[%c0_10, %c1_11, %c1_12, %c0_13] : memref<1x5x5x128xf32, #tpu.memory_space<vmem>>, vector<1x4x4x128xf32>
    %9 = vector.shape_cast %8 : vector<1x4x4x128xf32> to vector<4x4x128xf32>
    %10 = arith.maximumf %7, %9 : vector<4x4x128xf32>
    %c0_14 = arith.constant 0 : index
    %c0_15 = arith.constant 0 : index
    %c0_16 = arith.constant 0 : index
    %c0_17 = arith.constant 0 : index
    %11 = vector.load %arg2[%c0_14, %c0_15, %c0_16, %c0_17] : memref<1x5x5x128xf32, #tpu.memory_space<vmem>>, vector<1x4x4x128xf32>
    %12 = vector.shape_cast %11 : vector<1x4x4x128xf32> to vector<4x4x128xf32>
    %13 = arith.maximumf %10, %12 : vector<4x4x128xf32>
    %c0_18 = arith.constant 0 : index
    %c1_19 = arith.constant 1 : index
    %c0_20 = arith.constant 0 : index
    %c0_21 = arith.constant 0 : index
    %14 = vector.load %arg2[%c0_18, %c1_19, %c0_20, %c0_21] : memref<1x5x5x128xf32, #tpu.memory_space<vmem>>, vector<1x4x4x128xf32>
    %15 = vector.shape_cast %14 : vector<1x4x4x128xf32> to vector<4x4x128xf32>
    %16 = arith.maximumf %13, %15 : vector<4x4x128xf32>
    %c0_22 = arith.constant 0 : index
    %c0_23 = arith.constant 0 : index
    %c0_24 = arith.constant 0 : index
    %c0_25 = arith.constant 0 : index
    %17 = vector.load %arg3[%c0_22, %c0_23, %c0_24, %c0_25] : memref<1x5x5x128xf32, #tpu.memory_space<vmem>>, vector<1x4x4x128xf32>
    %18 = vector.shape_cast %17 : vector<1x4x4x128xf32> to vector<4x4x128xf32>
    %19 = arith.maximumf %16, %18 : vector<4x4x128xf32>
    %c0_26 = arith.constant 0 : index
    %c0_27 = arith.constant 0 : index
    %c1_28 = arith.constant 1 : index
    %c0_29 = arith.constant 0 : index
    %20 = vector.load %arg3[%c0_26, %c0_27, %c1_28, %c0_29] : memref<1x5x5x128xf32, #tpu.memory_space<vmem>>, vector<1x4x4x128xf32>
    %21 = vector.shape_cast %20 : vector<1x4x4x128xf32> to vector<4x4x128xf32>
    %22 = arith.maximumf %19, %21 : vector<4x4x128xf32>
    %c0_30 = arith.constant 0 : index
    %c0_31 = arith.constant 0 : index
    %c0_32 = arith.constant 0 : index
    %c0_33 = arith.constant 0 : index
    %23 = vector.load %arg4[%c0_30, %c0_31, %c0_32, %c0_33] : memref<1x5x5x128xf32, #tpu.memory_space<vmem>>, vector<1x4x4x128xf32>
    %24 = vector.shape_cast %23 : vector<1x4x4x128xf32> to vector<4x4x128xf32>
    %25 = arith.maximumf %22, %24 : vector<4x4x128xf32>
    %c0_34 = arith.constant 0 : index
    %c0_35 = arith.constant 0 : index
    %c0_36 = arith.constant 0 : index
    %c0_37 = arith.constant 0 : index
    %26 = vector.load %arg5[%c0_34, %c0_35, %c0_36, %c0_37] : memref<1x4x4x128xf32, #tpu.memory_space<vmem>>, vector<1x4x4x128xf32>
    %27 = vector.shape_cast %26 : vector<1x4x4x128xf32> to vector<4x4x128xf32>
    %28 = vector.shape_cast %25 : vector<4x4x128xf32> to vector<1x4x4x128xf32>
    tpu.vector_store %arg5[%c0_34, %c0_35, %c0_36, %c0_37], %28 {strides = array<i32>} : memref<1x4x4x128xf32, #tpu.memory_space<vmem>>, vector<1x4x4x128xf32>,
    return
  }
  func.func @transform_0(%arg0: i32) -> (i32, i32, i32, i32) {
    %c0_i32 = arith.constant 0 : i32
    %c0_i32_0 = arith.constant 0 : i32
    %c0_i32_1 = arith.constant 0 : i32
    %c0_i32_2 = arith.constant 0 : i32
    return %arg0, %c0_i32, %c0_i32_0, %c0_i32_1 : i32, i32, i32, i32
  }
  func.func @transform_1(%arg0: i32) -> (i32, i32, i32, i32) {
    %c0_i32 = arith.constant 0 : i32
    %c0_i32_0 = arith.constant 0 : i32
    %c0_i32_1 = arith.constant 0 : i32
    %c0_i32_2 = arith.constant 0 : i32
    return %arg0, %c0_i32, %c0_i32_0, %c0_i32_1 : i32, i32, i32, i32
  }
  func.func @transform_2(%arg0: i32) -> (i32, i32, i32, i32) {
    %c0_i32 = arith.constant 0 : i32
    %c0_i32_0 = arith.constant 0 : i32
    %c0_i32_1 = arith.constant 0 : i32
    %c0_i32_2 = arith.constant 0 : i32
    return %arg0, %c0_i32, %c0_i32_0, %c0_i32_1 : i32, i32, i32, i32
  }
  func.func @transform_3(%arg0: i32) -> (i32, i32, i32, i32) {
    %c0_i32 = arith.constant 0 : i32
    %c0_i32_0 = arith.constant 0 : i32
    %c0_i32_1 = arith.constant 0 : i32
    %c0_i32_2 = arith.constant 0 : i32
    return %arg0, %c0_i32, %c0_i32_0, %c0_i32_1 : i32, i32, i32, i32
  }
  func.func @transform_4(%arg0: i32) -> (i32, i32, i32, i32) {
    %c0_i32 = arith.constant 0 : i32
    %c0_i32_0 = arith.constant 0 : i32
    %c0_i32_1 = arith.constant 0 : i32
    %c0_i32_2 = arith.constant 0 : i32
    return %arg0, %c0_i32, %c0_i32_0, %c0_i32_1 : i32, i32, i32, i32
  }
}

</mosaic_0001>

<llo_original>
// kernel: resnet_input_block.4
$region0: #{resnet_input_block.4}
  #allocation0 [shape = 'u32[]', space=smem, size = 0x4, offset = 0x4, fixed_abs, tag = 'smem constant byte address 0x4 - core index']
  #allocation1 [shape = 'u32[144,128]{1,0:T(1,128)}', space=vmem, size = 0x12000, scoped, tag = 'internal scratch']
  %s0 = inlined_call_operand.vmem [shape: f32[128,128], index: 0, kind: input, shape index: {}]
  %s1 = inlined_call_operand.vmem [shape: f32[1,128], index: 1, kind: input, shape index: {}]
  %s2 = inlined_call_operand.vmem [shape: f32[1,128], index: 2, kind: input, shape index: {}]
  %s3 = inlined_call_operand.vmem [shape: f32[128,128], index: 3, kind: output, shape index: {}]
  %s4 = sld [smem:[#allocation0]]
  $region22: #{resnet_input_block.4} parent=0
    _
  %s6 = ssub.s32 1, %s4
  %s7 = scalar_select 0, %s6, %s4
  // Predicated region
  $region2: #{resnet_input_block.4} parent=0 // pred_check
    _
  $region3: #{resnet_input_block.4} parent=0 // pred_check_branch
    %9 = sbr.rel (0) target = $region5
  $region4: #{resnet_input_block.4} parent=0 // pred_region
    _
  $region5: #{resnet_input_block.4} parent=0 // pred_fallthru
    _
  // Predicated region
  $region6: #{resnet_input_block.4} parent=0 // pred_check
    _
  $region7: #{resnet_input_block.4} parent=0 // pred_check_branch
    %11 = sbr.rel (0) target = $region9
  $region8: #{resnet_input_block.4} parent=0 // pred_region
    _
  $region9: #{resnet_input_block.4} parent=0 // pred_fallthru
    _
  // Predicated region
  $region10: #{resnet_input_block.4} parent=0 // pred_check
    _
  $region11: #{resnet_input_block.4} parent=0 // pred_check_branch
    %13 = sbr.rel (0) target = $region13
  $region12: #{resnet_input_block.4} parent=0 // pred_region
    _
  $region13: #{resnet_input_block.4} parent=0 // pred_fallthru
    _
  %v14 = vld [vmem:[%s0] sm:$0xff]
  %v15 = vld [vmem:[%s0 + $0x8] sm:$0xff]
  %v16 = vld [vmem:[%s0 + $0x10] sm:$0xff]
  %v17 = vld [vmem:[%s0 + $0x18] sm:$0xff]
  %v18 = vld [vmem:[%s0 + $0x20] sm:$0xff]
  %v19 = vld [vmem:[%s0 + $0x28] sm:$0xff]
  %v20 = vld [vmem:[%s0 + $0x30] sm:$0xff]
  %v21 = vld [vmem:[%s0 + $0x38] sm:$0xff]
  %v22 = vld [vmem:[%s0 + $0x40] sm:$0xff]
  %v23 = vld [vmem:[%s0 + $0x48] sm:$0xff]
  %v24 = vld [vmem:[%s0 + $0x50] sm:$0xff]
  %v25 = vld [vmem:[%s0 + $0x58] sm:$0xff]
  %v26 = vld [vmem:[%s0 + $0x60] sm:$0xff]
  %v27 = vld [vmem:[%s0 + $0x68] sm:$0xff]
  %v28 = vld [vmem:[%s0 + $0x70] sm:$0xff]
  %v29 = vld [vmem:[%s0 + $0x78] sm:$0xff]
  %v30 = vld [vmem:[%s1] sm:$0x1]
  %v32 = vlaneseq
  %v33 = vshrl.u32 %v32, 7
  %v34 = vsub.s32 0, %v33
  %v35 = vrot.slane %v30, %v34
  %v37 = vmul.f32 %v14, %v35
  %v38 = vmul.f32 %v15, %v35
  %v39 = vmul.f32 %v16, %v35
  %v40 = vmul.f32 %v17, %v35
  %v41 = vmul.f32 %v18, %v35
  %v42 = vmul.f32 %v19, %v35
  %v43 = vmul.f32 %v20, %v35
  %v44 = vmul.f32 %v21, %v35
  %v45 = vmul.f32 %v22, %v35
  %v46 = vmul.f32 %v23, %v35
  %v47 = vmul.f32 %v24, %v35
  %v48 = vmul.f32 %v25, %v35
  %v49 = vmul.f32 %v26, %v35
  %v50 = vmul.f32 %v27, %v35
  %v51 = vmul.f32 %v28, %v35
  %v52 = vmul.f32 %v29, %v35
  %v53 = vld [vmem:[%s2] sm:$0x1]
  %v55 = vlaneseq
  %v56 = vshrl.u32 %v55, 7
  %v57 = vsub.s32 0, %v56
  %v58 = vrot.slane %v53, %v57
  %v60 = vadd.f32 %v37, %v58
  %v61 = vadd.f32 %v38, %v58
  %v62 = vadd.f32 %v39, %v58
  %v63 = vadd.f32 %v40, %v58
  %v64 = vadd.f32 %v41, %v58
  %v65 = vadd.f32 %v42, %v58
  %v66 = vadd.f32 %v43, %v58
  %v67 = vadd.f32 %v44, %v58
  %v68 = vadd.f32 %v45, %v58
  %v69 = vadd.f32 %v46, %v58
  %v70 = vadd.f32 %v47, %v58
  %v71 = vadd.f32 %v48, %v58
  %v72 = vadd.f32 %v49, %v58
  %v73 = vadd.f32 %v50, %v58
  %v74 = vadd.f32 %v51, %v58
  %v75 = vadd.f32 %v52, %v58
  %v76 = vmax.f32 %v60, 0.0
  %v77 = vmax.f32 %v61, 0.0
  %v78 = vmax.f32 %v62, 0.0
  %v79 = vmax.f32 %v63, 0.0
  %v80 = vmax.f32 %v64, 0.0
  %v81 = vmax.f32 %v65, 0.0
  %v82 = vmax.f32 %v66, 0.0
  %v83 = vmax.f32 %v67, 0.0
  %v84 = vmax.f32 %v68, 0.0
  %v85 = vmax.f32 %v69, 0.0
  %v86 = vmax.f32 %v70, 0.0
  %v87 = vmax.f32 %v71, 0.0
  %v88 = vmax.f32 %v72, 0.0
  %v89 = vmax.f32 %v73, 0.0
  %v90 = vmax.f32 %v74, 0.0
  %v91 = vmax.f32 %v75, 0.0
  %92 = vst [vmem:[%s3] sm:$0xff] %v76
  %93 = vst [vmem:[%s3 + $0x8] sm:$0xff] %v77
  %94 = vst [vmem:[%s3 + $0x10] sm:$0xff] %v78
  %95 = vst [vmem:[%s3 + $0x18] sm:$0xff] %v79
  %96 = vst [vmem:[%s3 + $0x20] sm:$0xff] %v80
  %97 = vst [vmem:[%s3 + $0x28] sm:$0xff] %v81
  %98 = vst [vmem:[%s3 + $0x30] sm:$0xff] %v82
  %99 = vst [vmem:[%s3 + $0x38] sm:$0xff] %v83
  %100 = vst [vmem:[%s3 + $0x40] sm:$0xff] %v84
  %101 = vst [vmem:[%s3 + $0x48] sm:$0xff] %v85
  %102 = vst [vmem:[%s3 + $0x50] sm:$0xff] %v86
  %103 = vst [vmem:[%s3 + $0x58] sm:$0xff] %v87
  %104 = vst [vmem:[%s3 + $0x60] sm:$0xff] %v88
  %105 = vst [vmem:[%s3 + $0x68] sm:$0xff] %v89
  %106 = vst [vmem:[%s3 + $0x70] sm:$0xff] %v90
  %107 = vst [vmem:[%s3 + $0x78] sm:$0xff] %v91
  // Predicated region
  $region14: #{resnet_input_block.4} parent=0 // pred_check
    _
  $region15: #{resnet_input_block.4} parent=0 // pred_check_branch
    %109 = sbr.rel (0) target = $region17
  $region16: #{resnet_input_block.4} parent=0 // pred_region
    _
  $region17: #{resnet_input_block.4} parent=0 // pred_fallthru
    _
  // Predicated region
  $region18: #{resnet_input_block.4} parent=0 // pred_check
    _
  $region19: #{resnet_input_block.4} parent=0 // pred_check_branch
    %111 = sbr.rel (0) target = $region21
  $region20: #{resnet_input_block.4} parent=0 // pred_region
    _
  $region21: #{resnet_input_block.4} parent=0 // pred_fallthru
    _

// kernel: resnet_input_block.3
$region0: #{resnet_input_block.3}
  #allocation0 [shape = 'u32[]', space=smem, size = 0x4, offset = 0x4, fixed_abs, tag = 'smem constant byte address 0x4 - core index']
  #allocation1 [shape = 'u32[144,128]{1,0:T(1,128)}', space=vmem, size = 0x12000, scoped, tag = 'internal scratch']
  %s0 = inlined_call_operand.vmem [shape: bf16[128,196], index: 0, kind: input, shape index: {}]
  %s1 = inlined_call_operand.vmem [shape: bf16[196,128], index: 1, kind: input, shape index: {}]
  %s2 = inlined_call_operand.vmem [shape: f32[128,128], index: 2, kind: output, shape index: {0}]
  %s3 = inlined_call_operand.vmem [shape: f32[1,8,128], index: 3, kind: output, shape index: {1}]
  %4 = xla_tuple %s2, %s3
  %s5 = sld [smem:[#allocation0]]
  $region26: #{resnet_input_block.3} parent=0
    _
  %s7 = ssub.s32 1, %s5
  %s8 = scalar_select 0, %s7, %s5
  // Predicated region
  $region2: #{resnet_input_block.3} parent=0 // pred_check
    _
  $region3: #{resnet_input_block.3} parent=0 // pred_check_branch
    %10 = sbr.rel (0) target = $region5
  $region4: #{resnet_input_block.3} parent=0 // pred_region
    _
  $region5: #{resnet_input_block.3} parent=0 // pred_fallthru
    _
  // Predicated region
  $region6: #{resnet_input_block.3} parent=0 // pred_check
    _
  $region7: #{resnet_input_block.3} parent=0 // pred_check_branch
    %12 = sbr.rel (0) target = $region9
  $region8: #{resnet_input_block.3} parent=0 // pred_region
    _
  $region9: #{resnet_input_block.3} parent=0 // pred_fallthru
    _
  %v14 = vld [vmem:[%s0] sm:$0xff]
  %v15 = vld [vmem:[%s0 + $0x8] sm:$0xff]
  %v16 = vld [vmem:[%s0 + $0x10] sm:$0xff]
  %v17 = vld [vmem:[%s0 + $0x18] sm:$0xff]
  %v18 = vld [vmem:[%s0 + $0x20] sm:$0xff]
  %v19 = vld [vmem:[%s0 + $0x28] sm:$0xff]
  %v20 = vld [vmem:[%s0 + $0x30] sm:$0xff]
  %v21 = vld [vmem:[%s0 + $0x38] sm:$0xff]
  %v22 = vld [vmem:[%s0 + $0x40] sm:$0xff]
  %v23 = vld [vmem:[%s0 + $0x48] sm:$0xff]
  %v24 = vld [vmem:[%s0 + $0x50] sm:$0xff]
  %v25 = vld [vmem:[%s0 + $0x58] sm:$0xff]
  %v26 = vld [vmem:[%s0 + $0x60] sm:$0xff]
  %v27 = vld [vmem:[%s0 + $0x68] sm:$0xff]
  %v28 = vld [vmem:[%s0 + $0x70] sm:$0xff]
  %v29 = vld [vmem:[%s0 + $0x78] sm:$0xff]
  %v30 = vld [vmem:[%s1] sm:$0xf]
  %v31 = vld [vmem:[%s1 + $0x4] sm:$0xf]
  %v32 = vld [vmem:[%s1 + $0x8] sm:$0xf]
  %v33 = vld [vmem:[%s1 + $0xc] sm:$0xf]
  %v34 = vld [vmem:[%s1 + $0x10] sm:$0xf]
  %v35 = vld [vmem:[%s1 + $0x14] sm:$0xf]
  %v36 = vld [vmem:[%s1 + $0x18] sm:$0xf]
  %v37 = vld [vmem:[%s1 + $0x1c] sm:$0xf]
  %v38 = vld [vmem:[%s1 + $0x20] sm:$0xf]
  %v39 = vld [vmem:[%s1 + $0x24] sm:$0xf]
  %v40 = vld [vmem:[%s1 + $0x28] sm:$0xf]
  %v41 = vld [vmem:[%s1 + $0x2c] sm:$0xf]
  %v42 = vld [vmem:[%s1 + $0x30] sm:$0xf]
  %v43 = vld [vmem:[%s1 + $0x34] sm:$0xf]
  %v44 = vld [vmem:[%s1 + $0x38] sm:$0xf]
  %v45 = vld [vmem:[%s1 + $0x3c] sm:$0xf]
  %v46 = vld [vmem:[%s1 + $0x40] sm:$0xf]
  %v47 = vld [vmem:[%s1 + $0x44] sm:$0xf]
  %v48 = vld [vmem:[%s1 + $0x48] sm:$0xf]
  %v49 = vld [vmem:[%s1 + $0x4c] sm:$0xf]
  %v50 = vld [vmem:[%s1 + $0x50] sm:$0xf]
  %v51 = vld [vmem:[%s1 + $0x54] sm:$0xf]
  %v52 = vld [vmem:[%s1 + $0x58] sm:$0xf]
  %v53 = vld [vmem:[%s1 + $0x5c] sm:$0xf]
  %v54 = vld [vmem:[%s1 + $0x60] sm:$0x3]
  %v71 = vunpack.c.l.b16 %v14
  %v72 = vunpack.c.h.b16 %v14
  %v73 = vunpack.c.l.b16 %v15
  %v74 = vunpack.c.h.b16 %v15
  %v75 = vunpack.c.l.b16 %v16
  %v76 = vunpack.c.h.b16 %v16
  %v77 = vunpack.c.l.b16 %v17
  %v78 = vunpack.c.h.b16 %v17
  %v79 = vunpack.c.l.b16 %v18
  %v80 = vunpack.c.h.b16 %v18
  %v81 = vunpack.c.l.b16 %v19
  %v82 = vunpack.c.h.b16 %v19
  %v83 = vunpack.c.l.b16 %v20
  %v84 = vunpack.c.h.b16 %v20
  %v85 = vunpack.c.l.b16 %v21
  %v86 = vunpack.c.h.b16 %v21
  %v87 = vunpack.c.l.b16 %v22
  %v88 = vunpack.c.h.b16 %v22
  %v89 = vunpack.c.l.b16 %v23
  %v90 = vunpack.c.h.b16 %v23
  %v91 = vunpack.c.l.b16 %v24
  %v92 = vunpack.c.h.b16 %v24
  %v93 = vunpack.c.l.b16 %v25
  %v94 = vunpack.c.h.b16 %v25
  %v95 = vunpack.c.l.b16 %v26
  %v96 = vunpack.c.h.b16 %v26
  %v97 = vunpack.c.l.b16 %v27
  %v98 = vunpack.c.h.b16 %v27
  %v99 = vunpack.c.l.b16 %v28
  %v100 = vunpack.c.h.b16 %v28
  %v101 = vunpack.c.l.b16 %v29
  %v102 = vunpack.c.h.b16 %v29
  %v103 = vpack.c.b16 %v73, %v71
  %v104 = vpack.c.b16 %v74, %v72
  %v105 = vpack.c.b16 %v77, %v75
  %v106 = vpack.c.b16 %v78, %v76
  %v107 = vpack.c.b16 %v81, %v79
  %v108 = vpack.c.b16 %v82, %v80
  %v109 = vpack.c.b16 %v85, %v83
  %v110 = vpack.c.b16 %v86, %v84
  %v111 = vpack.c.b16 %v89, %v87
  %v112 = vpack.c.b16 %v90, %v88
  %v113 = vpack.c.b16 %v93, %v91
  %v114 = vpack.c.b16 %v94, %v92
  %v115 = vpack.c.b16 %v97, %v95
  %v116 = vpack.c.b16 %v98, %v96
  %v117 = vpack.c.b16 %v101, %v99
  %v118 = vpack.c.b16 %v102, %v100
  %v152 = vunpack.c.l.b16 %v30
  %v153 = vunpack.c.l.b16 %v31
  %v154 = vunpack.c.l.b16 %v32
  %v155 = vunpack.c.l.b16 %v33
  %v156 = vunpack.c.l.b16 %v34
  %v157 = vunpack.c.l.b16 %v35
  %v158 = vunpack.c.l.b16 %v36
  %v159 = vunpack.c.l.b16 %v37
  %v160 = vunpack.c.l.b16 %v38
  %v161 = vunpack.c.l.b16 %v39
  %v162 = vunpack.c.l.b16 %v40
  %v163 = vunpack.c.l.b16 %v41
  %v164 = vunpack.c.l.b16 %v42
  %v165 = vunpack.c.l.b16 %v43
  %v166 = vunpack.c.l.b16 %v44
  %v167 = vunpack.c.l.b16 %v45
  %v168 = vunpack.c.l.b16 %v46
  %v169 = vunpack.c.l.b16 %v47
  %v170 = vunpack.c.l.b16 %v48
  %v171 = vunpack.c.l.b16 %v49
  %v172 = vunpack.c.l.b16 %v50
  %v173 = vunpack.c.l.b16 %v51
  %v174 = vunpack.c.l.b16 %v52
  %v175 = vunpack.c.l.b16 %v53
  %v176 = vunpack.c.l.b16 %v54
  %v177 = vpack.c.b16 %v153, %v152
  %v178 = vpack.c.b16 %v155, %v154
  %v179 = vpack.c.b16 %v157, %v156
  %v180 = vpack.c.b16 %v159, %v158
  %v181 = vpack.c.b16 %v161, %v160
  %v182 = vpack.c.b16 %v163, %v162
  %v183 = vpack.c.b16 %v165, %v164
  %v184 = vpack.c.b16 %v167, %v166
  %v185 = vpack.c.b16 %v169, %v168
  %v186 = vpack.c.b16 %v171, %v170
  %v187 = vpack.c.b16 %v173, %v172
  %v188 = vpack.c.b16 %v175, %v174
  %v189 = vpack.c.b16 %v176, %v176
  %vm202 = vcmask 556032
  %v204 = vsel %vm202, %v104, 0
  %v207 = vsel %vm202, %v106, 0
  %v210 = vsel %vm202, %v108, 0
  %v213 = vsel %vm202, %v110, 0
  %v216 = vsel %vm202, %v112, 0
  %v219 = vsel %vm202, %v114, 0
  %v222 = vsel %vm202, %v116, 0
  %v225 = vsel %vm202, %v118, 0
  %vm227 = vcmask 1041408
  %v229 = vsel %vm227, %v189, 0
  %231 = vmatprep.subr.bf16.mxu0 0
  %232 = vmatpush1.bf16.msra.mxu0 %v184
  %233 = vmatprep.subr.bf16.mxu0 0
  %234 = vmatpush1.bf16.msra.mxu0 %v183
  %235 = vmatprep.subr.bf16.mxu0 0
  %236 = vmatpush1.bf16.msra.mxu0 %v182
  %237 = vmatprep.subr.bf16.mxu0 0
  %238 = vmatpush1.bf16.msra.mxu0 %v181
  %239 = vmatprep.subr.bf16.mxu0 0
  %240 = vmatpush1.bf16.msra.mxu0 %v180
  %241 = vmatprep.subr.bf16.mxu0 0
  %242 = vmatpush1.bf16.msra.mxu0 %v179
  %243 = vmatprep.subr.bf16.mxu0 0
  %244 = vmatpush1.bf16.msra.mxu0 %v178
  %245 = vmatprep.subr.bf16.mxu0 0
  %246 = vmatpush1.bf16.msra.mxu0 %v177
  %247 = vmatprep.subr.bf16.mxu0 0
  %248 = vmatpush2.bf16.msra.mxu0 0
  %249 = vmatprep.subr.bf16.mxu0 0
  %250 = vmatpush2.bf16.msra.mxu0 0
  %251 = vmatprep.subr.bf16.mxu0 0
  %252 = vmatpush2.bf16.msra.mxu0 0
  %253 = vmatprep.subr.bf16.mxu0 0
  %254 = vmatpush2.bf16.msra.mxu0 %v229
  %255 = vmatprep.subr.bf16.mxu0 0
  %256 = vmatpush2.bf16.msra.mxu0 %v188
  %257 = vmatprep.subr.bf16.mxu0 0
  %258 = vmatpush2.bf16.msra.mxu0 %v187
  %259 = vmatprep.subr.bf16.mxu0 0
  %260 = vmatpush2.bf16.msra.mxu0 %v186
  %261 = vmatprep.subr.bf16.mxu0 0
  %262 = vmatpush2.bf16.msra.mxu0 %v185
  %263 = vmatprep.mubr.bf16.mxu0 %v204
  %264 = vmatmul.mubr.bf16.gmra.mxu0 %v103
  %v265 = vpop.f32.mrf.mxu0
  %v266 = vadd.f32 0.0, %v265
  %v267 = vpop.f32.mrf.mxu0
  %v268 = vpop.f32.mrf.mxu0
  %v269 = vadd.f32 0.0, %v268
  %v270 = vpop.f32.mrf.mxu0
  %271 = vmatprep.mubr.bf16.mxu0 %v207
  %272 = vmatmul.mubr.bf16.gmra.mxu0 %v105
  %v273 = vpop.f32.mrf.mxu0
  %v274 = vadd.f32 0.0, %v273
  %v275 = vpop.f32.mrf.mxu0
  %v276 = vpop.f32.mrf.mxu0
  %v277 = vadd.f32 0.0, %v276
  %v278 = vpop.f32.mrf.mxu0
  %279 = vmatprep.mubr.bf16.mxu0 %v210
  %280 = vmatmul.mubr.bf16.gmra.mxu0 %v107
  %v281 = vpop.f32.mrf.mxu0
  %v282 = vadd.f32 0.0, %v281
  %v283 = vpop.f32.mrf.mxu0
  %v284 = vpop.f32.mrf.mxu0
  %v285 = vadd.f32 0.0, %v284
  %v286 = vpop.f32.mrf.mxu0
  %287 = vmatprep.mubr.bf16.mxu0 %v213
  %288 = vmatmul.mubr.bf16.gmra.mxu0 %v109
  %v289 = vpop.f32.mrf.mxu0
  %v290 = vadd.f32 0.0, %v289
  %v291 = vpop.f32.mrf.mxu0
  %v292 = vpop.f32.mrf.mxu0
  %v293 = vadd.f32 0.0, %v292
  %v294 = vpop.f32.mrf.mxu0
  %295 = vmatprep.mubr.bf16.mxu0 %v216
  %296 = vmatmul.mubr.bf16.gmra.mxu0 %v111
  %v297 = vpop.f32.mrf.mxu0
  %v298 = vadd.f32 0.0, %v297
  %v299 = vpop.f32.mrf.mxu0
  %v300 = vpop.f32.mrf.mxu0
  %v301 = vadd.f32 0.0, %v300
  %v302 = vpop.f32.mrf.mxu0
  %303 = vmatprep.mubr.bf16.mxu0 %v219
  %304 = vmatmul.mubr.bf16.gmra.mxu0 %v113
  %v305 = vpop.f32.mrf.mxu0
  %v306 = vadd.f32 0.0, %v305
  %v307 = vpop.f32.mrf.mxu0
  %v308 = vpop.f32.mrf.mxu0
  %v309 = vadd.f32 0.0, %v308
  %v310 = vpop.f32.mrf.mxu0
  %311 = vmatprep.mubr.bf16.mxu0 %v222
  %312 = vmatmul.mubr.bf16.gmra.mxu0 %v115
  %v313 = vpop.f32.mrf.mxu0
  %v314 = vadd.f32 0.0, %v313
  %v315 = vpop.f32.mrf.mxu0
  %v316 = vpop.f32.mrf.mxu0
  %v317 = vadd.f32 0.0, %v316
  %v318 = vpop.f32.mrf.mxu0
  %319 = vmatprep.mubr.bf16.mxu0 %v225
  %320 = vmatmul.mubr.bf16.gmra.mxu0 %v117
  %v321 = vpop.f32.mrf.mxu0
  %v322 = vadd.f32 0.0, %v321
  %v323 = vpop.f32.mrf.mxu0
  %v324 = vpop.f32.mrf.mxu0
  %v325 = vadd.f32 0.0, %v324
  %v326 = vpop.f32.mrf.mxu0
  %327 = vdwg.mxu0
  %328 = vst [vmem:[%s2] sm:$0xff] %v266
  %329 = vst [vmem:[%s2 + $0x8] sm:$0xff] %v269
  %330 = vst [vmem:[%s2 + $0x10] sm:$0xff] %v274
  %331 = vst [vmem:[%s2 + $0x18] sm:$0xff] %v277
  %332 = vst [vmem:[%s2 + $0x20] sm:$0xff] %v282
  %333 = vst [vmem:[%s2 + $0x28] sm:$0xff] %v285
  %334 = vst [vmem:[%s2 + $0x30] sm:$0xff] %v290
  %335 = vst [vmem:[%s2 + $0x38] sm:$0xff] %v293
  %336 = vst [vmem:[%s2 + $0x40] sm:$0xff] %v298
  %337 = vst [vmem:[%s2 + $0x48] sm:$0xff] %v301
  %338 = vst [vmem:[%s2 + $0x50] sm:$0xff] %v306
  %339 = vst [vmem:[%s2 + $0x58] sm:$0xff] %v309
  %340 = vst [vmem:[%s2 + $0x60] sm:$0xff] %v314
  %341 = vst [vmem:[%s2 + $0x68] sm:$0xff] %v317
  %342 = vst [vmem:[%s2 + $0x70] sm:$0xff] %v322
  %343 = vst [vmem:[%s2 + $0x78] sm:$0xff] %v325
  %v344 = vadd.f32 %v266, %v269
  %v345 = vadd.f32 %v344, %v274
  %v346 = vadd.f32 %v345, %v277
  %v347 = vadd.f32 %v346, %v282
  %v348 = vadd.f32 %v347, %v285
  %v349 = vadd.f32 %v348, %v290
  %v350 = vadd.f32 %v349, %v293
  %v351 = vadd.f32 %v350, %v298
  %v352 = vadd.f32 %v351, %v301
  %v353 = vadd.f32 %v352, %v306
  %v354 = vadd.f32 %v353, %v309
  %v355 = vadd.f32 %v354, %v314
  %v356 = vadd.f32 %v355, %v317
  %v357 = vadd.f32 %v356, %v322
  %v358 = vadd.f32 %v357, %v325
  %v359 = vrot.slane %v358, 4
  %v360 = vadd.f32 %v358, %v359
  %v361 = vrot.slane %v360, 2
  %v362 = vadd.f32 %v360, %v361
  %v363 = vrot.slane %v362, 1
  %v364 = vadd.f32 %v362, %v363
  %v365 = vmul.f32 %v266, %v266
  %v366 = vmul.f32 %v269, %v269
  %v367 = vmul.f32 %v274, %v274
  %v368 = vmul.f32 %v277, %v277
  %v369 = vmul.f32 %v282, %v282
  %v370 = vmul.f32 %v285, %v285
  %v371 = vmul.f32 %v290, %v290
  %v372 = vmul.f32 %v293, %v293
  %v373 = vmul.f32 %v298, %v298
  %v374 = vmul.f32 %v301, %v301
  %v375 = vmul.f32 %v306, %v306
  %v376 = vmul.f32 %v309, %v309
  %v377 = vmul.f32 %v314, %v314
  %v378 = vmul.f32 %v317, %v317
  %v379 = vmul.f32 %v322, %v322
  %v380 = vmul.f32 %v325, %v325
  %v381 = vadd.f32 %v365, %v366
  %v382 = vadd.f32 %v381, %v367
  %v383 = vadd.f32 %v382, %v368
  %v384 = vadd.f32 %v383, %v369
  %v385 = vadd.f32 %v384, %v370
  %v386 = vadd.f32 %v385, %v371
  %v387 = vadd.f32 %v386, %v372
  %v388 = vadd.f32 %v387, %v373
  %v389 = vadd.f32 %v388, %v374
  %v390 = vadd.f32 %v389, %v375
  %v391 = vadd.f32 %v390, %v376
  %v392 = vadd.f32 %v391, %v377
  %v393 = vadd.f32 %v392, %v378
  %v394 = vadd.f32 %v393, %v379
  %v395 = vadd.f32 %v394, %v380
  %v396 = vrot.slane %v395, 4
  %v397 = vadd.f32 %v395, %v396
  %v398 = vrot.slane %v397, 2
  %v399 = vadd.f32 %v397, %v398
  %v400 = vrot.slane %v399, 1
  %v401 = vadd.f32 %v399, %v400
  %v402 = vlaneseq
  %v403 = vshrl.u32 %v402, 7
  %vm404 = vcmp.eq.s32.totalorder %v403, 0
  %v405 = vsel %vm404, %v364, 0.0
  %vm406 = vcmp.eq.s32.totalorder %v403, 1
  %v407 = vsel %vm406, %v401, 0.0
  %v408 = vadd.f32 %v405, %v407
  %409 = vst [vmem:[%s3] sm:$0xff] %v408
  // Predicated region
  $region10: #{resnet_input_block.3} parent=0 // pred_check
    _
  $region11: #{resnet_input_block.3} parent=0 // pred_check_branch
    %411 = sbr.rel (0) target = $region13
  $region12: #{resnet_input_block.3} parent=0 // pred_region
    _
  $region13: #{resnet_input_block.3} parent=0 // pred_fallthru
    _
  // Predicated region
  $region14: #{resnet_input_block.3} parent=0 // pred_check
    _
  $region15: #{resnet_input_block.3} parent=0 // pred_check_branch
    %413 = sbr.rel (0) target = $region17
  $region16: #{resnet_input_block.3} parent=0 // pred_region
    _
  $region17: #{resnet_input_block.3} parent=0 // pred_fallthru
    _
  // Predicated region
  $region18: #{resnet_input_block.3} parent=0 // pred_check
    _
  $region19: #{resnet_input_block.3} parent=0 // pred_check_branch
    %415 = sbr.rel (0) target = $region21
  $region20: #{resnet_input_block.3} parent=0 // pred_region
    _
  $region21: #{resnet_input_block.3} parent=0 // pred_fallthru
    _
  // Predicated region
  $region22: #{resnet_input_block.3} parent=0 // pred_check
    _
  $region23: #{resnet_input_block.3} parent=0 // pred_check_branch
    %417 = sbr.rel (0) target = $region25
  $region24: #{resnet_input_block.3} parent=0 // pred_region
    _
  $region25: #{resnet_input_block.3} parent=0 // pred_fallthru
    _

// kernel: resnet_input_block.5
$region0: #{resnet_input_block.5}
  #allocation0 [shape = 'u32[]', space=smem, size = 0x4, offset = 0x4, fixed_abs, tag = 'smem constant byte address 0x4 - core index']
  #allocation1 [shape = 'u32[144,128]{1,0:T(1,128)}', space=vmem, size = 0x12000, scoped, tag = 'internal scratch']
  %s0 = inlined_call_operand.vmem [shape: f32[2,5,5,128], index: 0, kind: input, shape index: {}]
  %s1 = inlined_call_operand.vmem [shape: f32[2,5,5,128], index: 1, kind: input, shape index: {}]
  %s2 = inlined_call_operand.vmem [shape: f32[2,5,5,128], index: 2, kind: input, shape index: {}]
  %s3 = inlined_call_operand.vmem [shape: f32[2,5,5,128], index: 3, kind: input, shape index: {}]
  %s4 = inlined_call_operand.vmem [shape: f32[2,4,4,128], index: 4, kind: output, shape index: {}]
  %s5 = sld [smem:[#allocation0]]
  $region49: #{resnet_input_block.5} parent=0
    _
  %s7 = ssub.s32 1, %s5
  %s8 = scalar_select 0, %s7, %s5
  loop: start=0, step=1, limit=4
  $region2: #{resnet_input_block.5} parent=0 // loop_pre_header
    _
  $region3: #{resnet_input_block.5} parent=0 // loop_header
    %s10 = sphi 0, %s14
    %p11 = scmp.ge.s32.totalorder %s10, 4
    %s20 = sphi 0, %s22
    %s23 = sphi 0, %s20
    %s24 = sphi 0, %s23
    %s40 = sphi 0, %s24
    %s46 = sphi 0, %s48
    %s49 = sphi 0, %s46
    %s50 = sphi 0, %s49
    %s66 = sphi 0, %s50
    %s72 = sphi 0, %s74
    %s75 = sphi 0, %s72
    %s76 = sphi 0, %s75
    %s92 = sphi 0, %s76
    %s98 = sphi 0, %s100
    %s101 = sphi 0, %s98
    %s102 = sphi 0, %s101
    %s118 = sphi 0, %s102
    %s124 = sphi 0, %s126
    %s127 = sphi 0, %s124
    %s128 = sphi 0, %s127
    %s144 = sphi 0, %s128
  $region4: #{resnet_input_block.5} parent=0 // loop_header_branch
    %13 = sbr.rel (%p11) target = $region8
  $region5: #{resnet_input_block.5} parent=0 // loop_body
    %s15 = ssub.s32 %s10, 1
    %s16 = ssub.s32 %s10, 2
    %s17 = sadd.s32 %s10, 1
    %s18 = ssub.s32 %s10, %s17
    %p19 = scmp.eq.s32.totalorder %s18, 0
    %s21 = sadd.s32 %s20, 1
    %s22 = scalar_select %p19, %s20, %s21
    %p25 = pneg %p19
    %p26 = scmp.eq.s32.totalorder %s10, 1
    %p27 = por %p25, %p26
    %p28 = scmp.ne.s32.totalorder %s20, %s23
    %p29 = scmp.eq.s32.totalorder %s10, 0
    %p30 = por %p28, %p29
    %p31 = scmp.ne.s32.totalorder %s20, %s23
    %p32 = scmp.eq.s32.totalorder %s15, 1
    %p33 = por %p31, %p32
    %p34 = scmp.ne.s32.totalorder %s23, %s24
    %p35 = scmp.eq.s32.totalorder %s15, 0
    %p36 = por %p34, %p35
    %p37 = scmp.ne.s32.totalorder %s23, %s24
    %p38 = scmp.eq.s32.totalorder %s16, 1
    %p39 = por %p37, %p38
    %p41 = scmp.ne.s32.totalorder %s24, %s40
    %p42 = scmp.eq.s32.totalorder %s16, 0
    %p43 = por %p41, %p42
    %s44 = ssub.s32 %s10, %s17
    %p45 = scmp.eq.s32.totalorder %s44, 0
    %s47 = sadd.s32 %s46, 1
    %s48 = scalar_select %p45, %s46, %s47
    %p51 = pneg %p45
    %p52 = scmp.eq.s32.totalorder %s10, 1
    %p53 = por %p51, %p52
    %p54 = scmp.ne.s32.totalorder %s46, %s49
    %p55 = scmp.eq.s32.totalorder %s10, 0
    %p56 = por %p54, %p55
    %p57 = scmp.ne.s32.totalorder %s46, %s49
    %p58 = scmp.eq.s32.totalorder %s15, 1
    %p59 = por %p57, %p58
    %p60 = scmp.ne.s32.totalorder %s49, %s50
    %p61 = scmp.eq.s32.totalorder %s15, 0
    %p62 = por %p60, %p61
    %p63 = scmp.ne.s32.totalorder %s49, %s50
    %p64 = scmp.eq.s32.totalorder %s16, 1
    %p65 = por %p63, %p64
    %p67 = scmp.ne.s32.totalorder %s50, %s66
    %p68 = scmp.eq.s32.totalorder %s16, 0
    %p69 = por %p67, %p68
    %s70 = ssub.s32 %s10, %s17
    %p71 = scmp.eq.s32.totalorder %s70, 0
    %s73 = sadd.s32 %s72, 1
    %s74 = scalar_select %p71, %s72, %s73
    %p77 = pneg %p71
    %p78 = scmp.eq.s32.totalorder %s10, 1
    %p79 = por %p77, %p78
    %p80 = scmp.ne.s32.totalorder %s72, %s75
    %p81 = scmp.eq.s32.totalorder %s10, 0
    %p82 = por %p80, %p81
    %p83 = scmp.ne.s32.totalorder %s72, %s75
    %p84 = scmp.eq.s32.totalorder %s15, 1
    %p85 = por %p83, %p84
    %p86 = scmp.ne.s32.totalorder %s75, %s76
    %p87 = scmp.eq.s32.totalorder %s15, 0
    %p88 = por %p86, %p87
    %p89 = scmp.ne.s32.totalorder %s75, %s76
    %p90 = scmp.eq.s32.totalorder %s16, 1
    %p91 = por %p89, %p90
    %p93 = scmp.ne.s32.totalorder %s76, %s92
    %p94 = scmp.eq.s32.totalorder %s16, 0
    %p95 = por %p93, %p94
    %s96 = ssub.s32 %s10, %s17
    %p97 = scmp.eq.s32.totalorder %s96, 0
    %s99 = sadd.s32 %s98, 1
    %s100 = scalar_select %p97, %s98, %s99
    %p103 = pneg %p97
    %p104 = scmp.eq.s32.totalorder %s10, 1
    %p105 = por %p103, %p104
    %p106 = scmp.ne.s32.totalorder %s98, %s101
    %p107 = scmp.eq.s32.totalorder %s10, 0
    %p108 = por %p106, %p107
    %p109 = scmp.ne.s32.totalorder %s98, %s101
    %p110 = scmp.eq.s32.totalorder %s15, 1
    %p111 = por %p109, %p110
    %p112 = scmp.ne.s32.totalorder %s101, %s102
    %p113 = scmp.eq.s32.totalorder %s15, 0
    %p114 = por %p112, %p113
    %p115 = scmp.ne.s32.totalorder %s101, %s102
    %p116 = scmp.eq.s32.totalorder %s16, 1
    %p117 = por %p115, %p116
    %p119 = scmp.ne.s32.totalorder %s102, %s118
    %p120 = scmp.eq.s32.totalorder %s16, 0
    %p121 = por %p119, %p120
    %s122 = ssub.s32 %s10, %s17
    %p123 = scmp.eq.s32.totalorder %s122, 0
    %s125 = sadd.s32 %s124, 1
    %s126 = scalar_select %p123, %s124, %s125
    %p129 = pneg %p123
    %p130 = scmp.eq.s32.totalorder %s10, 1
    %p131 = por %p129, %p130
    %p132 = scmp.ne.s32.totalorder %s124, %s127
    %p133 = scmp.eq.s32.totalorder %s10, 0
    %p134 = por %p132, %p133
    %p135 = scmp.ne.s32.totalorder %s124, %s127
    %p136 = scmp.eq.s32.totalorder %s15, 1
    %p137 = por %p135, %p136
    %p138 = scmp.ne.s32.totalorder %s127, %s128
    %p139 = scmp.eq.s32.totalorder %s15, 0
    %p140 = por %p138, %p139
    %p141 = scmp.ne.s32.totalorder %s127, %s128
    %p142 = scmp.eq.s32.totalorder %s16, 1
    %p143 = por %p141, %p142
    %p145 = scmp.ne.s32.totalorder %s128, %s144
    %p146 = scmp.eq.s32.totalorder %s16, 0
    %p147 = por %p145, %p146
    %p148 = scmp.le.s32.totalorder 1, %s10
    %p149 = scmp.lt.s32.totalorder %s10, 3
    %p150 = pnand %p148, %p149
    %p151 = pneg %p150
    // Predicated region
    $region9: #{resnet_input_block.5} parent=5 // pred_check
      _
    $region10: #{resnet_input_block.5} parent=5 // pred_check_branch
      %153 = sbr.rel (%p150) target = $region12
    $region11: #{resnet_input_block.5} parent=5 // pred_region
      %s154 = ssub.s32 %s10, 1
    $region12: #{resnet_input_block.5} parent=5 // pred_fallthru
      _
    %p155 = scmp.lt.s32.totalorder %s10, 2
    // Predicated region
    $region13: #{resnet_input_block.5} parent=5 // pred_check
      %p156 = pneg %p155
    $region14: #{resnet_input_block.5} parent=5 // pred_check_branch
      %158 = sbr.rel (%p156) target = $region16
    $region15: #{resnet_input_block.5} parent=5 // pred_region
      // Predicated region
      $region17: #{resnet_input_block.5} parent=15 // pred_check
        %p159 = pneg %p30
      $region18: #{resnet_input_block.5} parent=15 // pred_check_branch
        %161 = sbr.rel (%p159) target = $region20
      $region19: #{resnet_input_block.5} parent=15 // pred_region
        %p162 = scmp.lt.s32.totalorder %s10, 1
        %s163 = scalar_select %p162, %s10, 1
        %s164 = smul.addr %s163, 5
        %s165 = smul.addr %s164, 8
        %s166 = scalar_lea.vmem %s0, %s165
      $region20: #{resnet_input_block.5} parent=15 // pred_fallthru
        _
      // Predicated region
      $region21: #{resnet_input_block.5} parent=15 // pred_check
        %p167 = pneg %p56
      $region22: #{resnet_input_block.5} parent=15 // pred_check_branch
        %169 = sbr.rel (%p167) target = $region24
      $region23: #{resnet_input_block.5} parent=15 // pred_region
        %p170 = scmp.lt.s32.totalorder %s10, 1
        %s171 = scalar_select %p170, %s10, 1
        %s172 = smul.addr %s171, 5
        %s173 = smul.addr %s172, 8
        %s174 = scalar_lea.vmem %s1, %s173
      $region24: #{resnet_input_block.5} parent=15 // pred_fallthru
        _
      // Predicated region
      $region25: #{resnet_input_block.5} parent=15 // pred_check
        %p175 = pneg %p82
      $region26: #{resnet_input_block.5} parent=15 // pred_check_branch
        %177 = sbr.rel (%p175) target = $region28
      $region27: #{resnet_input_block.5} parent=15 // pred_region
        %p178 = scmp.lt.s32.totalorder %s10, 1
        %s179 = scalar_select %p178, %s10, 1
        %s180 = smul.addr %s179, 5
        %s181 = smul.addr %s180, 8
        %s182 = scalar_lea.vmem %s2, %s181
      $region28: #{resnet_input_block.5} parent=15 // pred_fallthru
        _
      // Predicated region
      $region29: #{resnet_input_block.5} parent=15 // pred_check
        %p183 = pneg %p108
      $region30: #{resnet_input_block.5} parent=15 // pred_check_branch
        %185 = sbr.rel (%p183) target = $region32
      $region31: #{resnet_input_block.5} parent=15 // pred_region
        %p186 = scmp.lt.s32.totalorder %s10, 1
        %s187 = scalar_select %p186, %s10, 1
        %s188 = smul.addr %s187, 5
        %s189 = smul.addr %s188, 8
        %s190 = scalar_lea.vmem %s3, %s189
      $region32: #{resnet_input_block.5} parent=15 // pred_fallthru
        _
    $region16: #{resnet_input_block.5} parent=5 // pred_fallthru
      _
    %p191 = scmp.le.s32.totalorder 1, %s10
    %p192 = scmp.lt.s32.totalorder %s10, 3
    %p193 = pnand %p191, %p192
    %p194 = pneg %p193
    // Predicated region
    $region33: #{resnet_input_block.5} parent=5 // pred_check
      _
    $region34: #{resnet_input_block.5} parent=5 // pred_check_branch
      %196 = sbr.rel (%p193) target = $region36
    $region35: #{resnet_input_block.5} parent=5 // pred_region
      %s197 = ssub.s32 %s10, 1
      %p198 = scmp.lt.s32.totalorder %s15, 1
      %s199 = scalar_select %p198, %s15, 1
      %s200 = smul.addr %s199, 5
      %s201 = smul.addr %s200, 8
      %s202 = scalar_lea.vmem %s0, %s201
      %p203 = pneg %p36
      %p204 = pneg %p33
      %p205 = scmp.lt.s32.totalorder %s15, 1
      %s206 = scalar_select %p205, %s15, 1
      %s207 = smul.addr %s206, 5
      %s208 = smul.addr %s207, 8
      %s209 = scalar_lea.vmem %s1, %s208
      %p210 = pneg %p62
      %p211 = pneg %p59
      %p212 = scmp.lt.s32.totalorder %s15, 1
      %s213 = scalar_select %p212, %s15, 1
      %s214 = smul.addr %s213, 5
      %s215 = smul.addr %s214, 8
      %s216 = scalar_lea.vmem %s2, %s215
      %p217 = pneg %p88
      %p218 = pneg %p85
      %p219 = scmp.lt.s32.totalorder %s15, 1
      %s220 = scalar_select %p219, %s15, 1
      %s221 = smul.addr %s220, 5
      %s222 = smul.addr %s221, 8
      %s223 = scalar_lea.vmem %s3, %s222
      %p224 = pneg %p114
      %p225 = pneg %p111
      %p226 = pneg %p140
      %p227 = pneg %p137
      %p228 = scmp.lt.s32.totalorder %s15, 1
      %s229 = scalar_select %p228, %s15, 1
      %s230 = smul.addr %s229, 4
      %s231 = smul.addr %s230, 4
      %s232 = scalar_lea.vmem %s4, %s231
      %p233 = scmp.lt.s32.totalorder %s15, 1
      %s234 = scalar_select %p233, %s15, 1
      %s235 = smul.addr %s234, 5
      %s236 = smul.addr %s235, 8
      %s237 = scalar_lea.vmem %s0, %s236
      %p238 = scmp.lt.s32.totalorder %s15, 1
      %s239 = scalar_select %p238, %s15, 1
      %s240 = smul.addr %s239, 5
      %s241 = smul.addr %s240, 8
      %s242 = scalar_lea.vmem %s1, %s241
      %p243 = scmp.lt.s32.totalorder %s15, 1
      %s244 = scalar_select %p243, %s15, 1
      %s245 = smul.addr %s244, 5
      %s246 = smul.addr %s245, 8
      %s247 = scalar_lea.vmem %s2, %s246
      %p248 = scmp.lt.s32.totalorder %s15, 1
      %s249 = scalar_select %p248, %s15, 1
      %s250 = smul.addr %s249, 5
      %s251 = smul.addr %s250, 8
      %s252 = scalar_lea.vmem %s3, %s251
      %p253 = scmp.lt.s32.totalorder %s15, 1
      %s254 = scalar_select %p253, %s15, 1
      %s255 = smul.addr %s254, 4
      %s256 = smul.addr %s255, 4
      %s257 = scalar_lea.vmem %s4, %s256
      %v258 = vld [vmem:[%s237] sm:$0xf]
      %v259 = vld [vmem:[%s237 + $0x8] sm:$0xf]
      %v260 = vld [vmem:[%s237 + $0x10] sm:$0xf]
      %v261 = vld [vmem:[%s237 + $0x18] sm:$0xf]
      %v262 = vld [vmem:[%s237 + $0x1] sm:$0xf]
      %v263 = vld [vmem:[%s237 + $0x9] sm:$0xf]
      %v264 = vld [vmem:[%s237 + $0x11] sm:$0xf]
      %v265 = vld [vmem:[%s237 + $0x19] sm:$0xf]
      %v266 = vmax.f32 %v258, %v262
      %v267 = vmax.f32 %v259, %v263
      %v268 = vmax.f32 %v260, %v264
      %v269 = vmax.f32 %v261, %v265
      %s270 = scalar_lea.vmem %s237, 8
      %v271 = vld [vmem:[%s270] sm:$0xf]
      %v272 = vld [vmem:[%s270 + $0x8] sm:$0xf]
      %v273 = vld [vmem:[%s270 + $0x10] sm:$0xf]
      %v274 = vld [vmem:[%s270 + $0x18] sm:$0xf]
      %v275 = vmax.f32 %v266, %v271
      %v276 = vmax.f32 %v267, %v272
      %v277 = vmax.f32 %v268, %v273
      %v278 = vmax.f32 %v269, %v274
      %v279 = vld [vmem:[%s270 + $0x1] sm:$0xf]
      %v280 = vld [vmem:[%s270 + $0x9] sm:$0xf]
      %v281 = vld [vmem:[%s270 + $0x11] sm:$0xf]
      %v282 = vld [vmem:[%s270 + $0x19] sm:$0xf]
      %v283 = vmax.f32 %v275, %v279
      %v284 = vmax.f32 %v276, %v280
      %v285 = vmax.f32 %v277, %v281
      %v286 = vmax.f32 %v278, %v282
      %v287 = vld [vmem:[%s242] sm:$0xf]
      %v288 = vld [vmem:[%s242 + $0x8] sm:$0xf]
      %v289 = vld [vmem:[%s242 + $0x10] sm:$0xf]
      %v290 = vld [vmem:[%s242 + $0x18] sm:$0xf]
      %v291 = vmax.f32 %v283, %v287
      %v292 = vmax.f32 %v284, %v288
      %v293 = vmax.f32 %v285, %v289
      %v294 = vmax.f32 %v286, %v290
      %s295 = scalar_lea.vmem %s242, 8
      %v296 = vld [vmem:[%s295] sm:$0xf]
      %v297 = vld [vmem:[%s295 + $0x8] sm:$0xf]
      %v298 = vld [vmem:[%s295 + $0x10] sm:$0xf]
      %v299 = vld [vmem:[%s295 + $0x18] sm:$0xf]
      %v300 = vmax.f32 %v291, %v296
      %v301 = vmax.f32 %v292, %v297
      %v302 = vmax.f32 %v293, %v298
      %v303 = vmax.f32 %v294, %v299
      %v304 = vld [vmem:[%s247] sm:$0xf]
      %v305 = vld [vmem:[%s247 + $0x8] sm:$0xf]
      %v306 = vld [vmem:[%s247 + $0x10] sm:$0xf]
      %v307 = vld [vmem:[%s247 + $0x18] sm:$0xf]
      %v308 = vmax.f32 %v300, %v304
      %v309 = vmax.f32 %v301, %v305
      %v310 = vmax.f32 %v302, %v306
      %v311 = vmax.f32 %v303, %v307
      %v312 = vld [vmem:[%s247 + $0x1] sm:$0xf]
      %v313 = vld [vmem:[%s247 + $0x9] sm:$0xf]
      %v314 = vld [vmem:[%s247 + $0x11] sm:$0xf]
      %v315 = vld [vmem:[%s247 + $0x19] sm:$0xf]
      %v316 = vmax.f32 %v308, %v312
      %v317 = vmax.f32 %v309, %v313
      %v318 = vmax.f32 %v310, %v314
      %v319 = vmax.f32 %v311, %v315
      %v320 = vld [vmem:[%s252] sm:$0xf]
      %v321 = vld [vmem:[%s252 + $0x8] sm:$0xf]
      %v322 = vld [vmem:[%s252 + $0x10] sm:$0xf]
      %v323 = vld [vmem:[%s252 + $0x18] sm:$0xf]
      %v324 = vmax.f32 %v316, %v320
      %v325 = vmax.f32 %v317, %v321
      %v326 = vmax.f32 %v318, %v322
      %v327 = vmax.f32 %v319, %v323
      %328 = vst [vmem:[%s257] sm:$0xf] %v324
      %329 = vst [vmem:[%s257 + $0x4] sm:$0xf] %v325
      %330 = vst [vmem:[%s257 + $0x8] sm:$0xf] %v326
      %331 = vst [vmem:[%s257 + $0xc] sm:$0xf] %v327
      %p332 = scmp.lt.s32.totalorder %s15, 1
      %s333 = scalar_select %p332, %s15, 1
      %s334 = smul.addr %s333, 4
      %s335 = smul.addr %s334, 4
      %s336 = scalar_lea.vmem %s4, %s335
      // Predicated region
      $region37: #{resnet_input_block.5} parent=35 // pred_check
        %p337 = pneg %p137
      $region38: #{resnet_input_block.5} parent=35 // pred_check_branch
        %339 = sbr.rel (%p337) target = $region40
      $region39: #{resnet_input_block.5} parent=35 // pred_region
        _
      $region40: #{resnet_input_block.5} parent=35 // pred_fallthru
        _
    $region36: #{resnet_input_block.5} parent=5 // pred_fallthru
      _
    %p340 = scmp.le.s32.totalorder 2, %s10
    // Predicated region
    $region41: #{resnet_input_block.5} parent=5 // pred_check
      %p341 = pneg %p340
    $region42: #{resnet_input_block.5} parent=5 // pred_check_branch
      %343 = sbr.rel (%p341) target = $region44
    $region43: #{resnet_input_block.5} parent=5 // pred_region
      %s344 = ssub.s32 %s10, 2
      // Predicated region
      $region45: #{resnet_input_block.5} parent=43 // pred_check
        %p345 = pneg %p143
      $region46: #{resnet_input_block.5} parent=43 // pred_check_branch
        %347 = sbr.rel (%p345) target = $region48
      $region47: #{resnet_input_block.5} parent=43 // pred_region
        %p348 = scmp.lt.s32.totalorder %s16, 1
        %s349 = scalar_select %p348, %s16, 1
        %s350 = smul.addr %s349, 4
        %s351 = smul.addr %s350, 4
        %s352 = scalar_lea.vmem %s4, %s351
      $region48: #{resnet_input_block.5} parent=43 // pred_fallthru
        _
    $region44: #{resnet_input_block.5} parent=5 // pred_fallthru
      _
  $region6: #{resnet_input_block.5} parent=0 // loop_footer
    %s14 = sadd.s32 1, %s10
  $region7: #{resnet_input_block.5} parent=0 // loop_footer_branch
    %9 = sbr.rel target = $region3
  $region8: #{resnet_input_block.5} parent=0 // loop_exit
    _

</llo_original>
